<compile_context>
chip_gen: v7x
topology: tpu7x:2x2x1
jax: 0.10.0
libtpu: 0.0.40
codegen_flags: <defaults>
</compile_context>

<pallas_src>
import functools

import jax
import jax.numpy as jnp
from jax import lax
from jax.experimental import pallas as pl
from jax.experimental.pallas import tpu as pltpu


_VMEM_BUDGET_BYTES = 24 * 1024 * 1024   # target double-buffered working set
_VMEM_LIMIT_BYTES = 48 * 1024 * 1024    # scoped VMEM limit (fits v7x's 64 MiB)

_COMPILER_PARAMS = pltpu.CompilerParams(
    dimension_semantics=("parallel",),   # shard row tiles across TCs on v7x
    vmem_limit_bytes=_VMEM_LIMIT_BYTES,
)


def _row_tile(rows, d_model, n_tensors, itemsize):
    """Largest multiple-of-8 row tile whose double-buffered VMEM footprint
    (n_tensors x 2 buffers x TR x d_model x itemsize) fits the budget, capped
    at 1024 rows.  Small inputs fall back to a single full-array block."""
    per_row = 2 * n_tensors * d_model * itemsize
    max_tr = max(8, (_VMEM_BUDGET_BYTES // per_row) // 8 * 8)
    tr = min(1024, max_tr)
    if rows <= tr:
        return rows          # block == full array dims: always legal
    return tr


# ----------------------------- Kernel 1: LayerNorm ---------------------------
def _layernorm_kernel(x_ref, gamma_ref, beta_ref, o_ref, *, eps):
    x = x_ref[...].astype(jnp.float32)                        # [TR, D]
    d = x.shape[-1]
    mean = jnp.mean(x, axis=-1, keepdims=True)                # [TR, 1]
    centered = x - mean
    # torch.Tensor.std default is unbiased (ddof = 1)
    var = jnp.sum(centered * centered, axis=-1, keepdims=True) * (1.0 / max(d - 1, 1))
    inv = 1.0 / (jnp.sqrt(var) + eps)                         # one divide per ROW
    gamma = gamma_ref[...].astype(jnp.float32)                # [1, D]
    beta = beta_ref[...].astype(jnp.float32)                  # [1, D]
    o_ref[...] = (centered * inv * gamma + beta).astype(o_ref.dtype)


def layer_norm(x2d, gamma, beta, *, eps=1e-6):
    rows, d_model = x2d.shape
    tr = _row_tile(rows, d_model, n_tensors=2, itemsize=x2d.dtype.itemsize)
    kernel = functools.partial(_layernorm_kernel, eps=eps)
    return pl.pallas_call(
        kernel,
        out_shape=jax.ShapeDtypeStruct((rows, d_model), x2d.dtype),
        grid=(pl.cdiv(rows, tr),),
        in_specs=[
            pl.BlockSpec((tr, d_model), lambda i: (i, 0)),
            pl.BlockSpec((1, d_model), lambda i: (0, 0)),
            pl.BlockSpec((1, d_model), lambda i: (0, 0)),
        ],
        out_specs=pl.BlockSpec((tr, d_model), lambda i: (i, 0)),
        compiler_params=_COMPILER_PARAMS,
    )(x2d, gamma.reshape(1, d_model), beta.reshape(1, d_model))


# ------------------- Kernel 2: residual add + dropout ------------------------
def _add_dropout_kernel(seed_ref, x_ref, y_ref, o_ref, *, drop_threshold, inv_keep):
    x = x_ref[...].astype(jnp.float32)                        # residual
    y = y_ref[...].astype(jnp.float32)                        # sublayer output
    if drop_threshold > 0:                                    # static: p > 0
        tr, d = x_ref.shape
        base = pl.program_id(0) * tr                          # global row offset
        row = lax.broadcasted_iota(jnp.int32, (tr, d), 0)
        col = lax.broadcasted_iota(jnp.int32, (tr, d), 1)
        idx = ((base + row) * d + col).astype(jnp.uint32)     # global element id
        # splitmix32 / murmur3-finalizer style hash of (index, seed)
        z = idx + seed_ref[0].astype(jnp.uint32) * jnp.uint32(0x9E3779B9)
        z = (z ^ (z >> 16)) * jnp.uint32(0x85EBCA6B)
        z = (z ^ (z >> 13)) * jnp.uint32(0xC2B2AE35)
        z = z ^ (z >> 16)
        keep = z >= jnp.uint32(drop_threshold)                # P(keep) = 1 - p (to 2^-32)
        y = jnp.where(keep, y * jnp.float32(inv_keep), 0.0)
    o_ref[...] = (x + y).astype(o_ref.dtype)


def add_dropout(x2d, y2d, p, seed):
    rows, d_model = x2d.shape
    p = float(p)
    drop_threshold = min(int(round(p * 4294967296.0)), 4294967295)
    inv_keep = 1.0 / (1.0 - p) if p < 1.0 else 0.0
    tr = _row_tile(rows, d_model, n_tensors=3, itemsize=x2d.dtype.itemsize)
    kernel = functools.partial(_add_dropout_kernel,
                               drop_threshold=drop_threshold, inv_keep=inv_keep)
    return pl.pallas_call(
        kernel,
        out_shape=jax.ShapeDtypeStruct((rows, d_model), x2d.dtype),
        grid=(pl.cdiv(rows, tr),),
        in_specs=[
            pl.BlockSpec(memory_space=pltpu.MemorySpace.SMEM),  # seed scalar
            pl.BlockSpec((tr, d_model), lambda i: (i, 0)),      # residual x
            pl.BlockSpec((tr, d_model), lambda i: (i, 0)),      # sublayer out
        ],
        out_specs=pl.BlockSpec((tr, d_model), lambda i: (i, 0)),
        # residual input is dead after the add -> reuse its HBM buffer
        input_output_aliases={1: 0},
        compiler_params=_COMPILER_PARAMS,
    )(jnp.asarray([seed], dtype=jnp.int32), x2d, y2d)


# --------------------------------- AddNorm -----------------------------------
def add_norm(x, sublayer, gamma, beta, *, dropout_p, eps=1e-6, seed=0, training=True):
    """x: [batch, seq, d_model]; sublayer: arbitrary callable (plain JAX glue)."""
    b, s, d = x.shape
    x2d = x.reshape(b * s, d)
    normed = layer_norm(x2d, gamma, beta, eps=eps)                  # Pallas kernel 1
    sub_out = sublayer(normed.reshape(b, s, d)).reshape(b * s, d)   # opaque sublayer
    p = float(dropout_p) if training else 0.0
    out2d = add_dropout(x2d, sub_out, p, seed)                      # Pallas kernel 2
    return out2d.reshape(b, s, d)


if __name__ == "__main__":
    batch, seq, d_model = 2, 8, 32
    dropout_p = 0.1
    eps = 1e-6

    key = jax.random.PRNGKey(0)
    kx, kw = jax.random.split(key)
    x = jax.random.normal(kx, (batch, seq, d_model), dtype=jnp.float32)
    gamma = jnp.ones((d_model,), dtype=jnp.float32)   # LayerNorm.__init__ defaults
    beta = jnp.zeros((d_model,), dtype=jnp.float32)
    w = jax.random.normal(kw, (d_model, d_model), dtype=jnp.float32) * 0.02

    @jax.jit
    def fwd_train(x, gamma, beta, w):
        return add_norm(x, lambda h: h @ w, gamma, beta,
                        dropout_p=dropout_p, eps=eps, seed=42, training=True)

    @jax.jit
    def fwd_eval(x, gamma, beta, w):
        return add_norm(x, lambda h: h @ w, gamma, beta,
                        dropout_p=dropout_p, eps=eps, seed=42, training=False)

    # Eval mode (dropout off) is deterministic -> check against a plain-JAX reference.
    def ref_eval(xr):
        mean = jnp.mean(xr, axis=-1, keepdims=True)
        std = jnp.std(xr, axis=-1, keepdims=True, ddof=1)   # torch.Tensor.std (unbiased)
        normed = gamma * (xr - mean) / (std + eps) + beta
        return xr + normed @ w

    out_eval = fwd_eval(x, gamma, beta, w)
    jax.block_until_ready(out_eval)
    assert out_eval.shape == x.shape and out_eval.dtype == x.dtype
    assert jnp.allclose(out_eval, ref_eval(x), atol=1e-4, rtol=1e-4), "eval-mode mismatch"

    # Train mode (dropout on): shape/dtype/finiteness sanity check.
    # TODO(synk): torch's dropout RNG stream is not reproduced bit-exactly.
    out = fwd_train(x, gamma, beta, w)
    jax.block_until_ready(out)
    assert out.shape == x.shape and out.dtype == x.dtype
    assert bool(jnp.all(jnp.isfinite(out)))
    print("KERNEL_OK")
</pallas_src>

<mosaic_0001>
module attributes {stable_mosaic.version = 11 : i64} {
  func.func @_add_dropout_kernel(%arg0: i32, %arg1: memref<1xi32, #tpu.memory_space<smem>>, %arg2: memref<16x32xf32, #tpu.memory_space<vmem>>, %arg3: memref<16x32xf32, #tpu.memory_space<vmem>>, %arg4: memref<16x32xf32, #tpu.memory_space<vmem>>) attributes {dimension_semantics = [#tpu.dimension_semantics<parallel>], iteration_bounds = array<i64: 1>, scalar_prefetch = 0 : i64, scratch_operands = 0 : i64, tpu.core_type = #tpu.core_type<tc>, window_params = [{transform_indices = @transform_0, window_bounds = array<i64: 1>}, {transform_indices = @transform_1, window_bounds = array<i64: 16, 32>}, {transform_indices = @transform_2, window_bounds = array<i64: 16, 32>}, {transform_indices = @transform_3, window_bounds = array<i64: 16, 32>}]} {
    %c0 = arith.constant 0 : index
    %c0_0 = arith.constant 0 : index
    %0 = vector.load %arg2[%c0, %c0_0] : memref<16x32xf32, #tpu.memory_space<vmem>>, vector<16x32xf32>
    %c0_1 = arith.constant 0 : index
    %c0_2 = arith.constant 0 : index
    %1 = vector.load %arg3[%c0_1, %c0_2] : memref<16x32xf32, #tpu.memory_space<vmem>>, vector<16x32xf32>
    %2 = arith.addf %0, %1 : vector<16x32xf32>
    %c0_3 = arith.constant 0 : index
    %c0_4 = arith.constant 0 : index
    %3 = vector.load %arg4[%c0_3, %c0_4] : memref<16x32xf32, #tpu.memory_space<vmem>>, vector<16x32xf32>
    tpu.vector_store %arg4[%c0_3, %c0_4], %2 {strides = array<i32>} : memref<16x32xf32, #tpu.memory_space<vmem>>, vector<16x32xf32>,
    return
  }
  func.func @transform_0(%arg0: i32) -> i32 {
    %c0_i32 = arith.constant 0 : i32
    %c0_i32_0 = arith.constant 0 : i32
    return %c0_i32 : i32
  }
  func.func @transform_1(%arg0: i32) -> (i32, i32) {
    %c0_i32 = arith.constant 0 : i32
    %c0_i32_0 = arith.constant 0 : i32
    return %arg0, %c0_i32 : i32, i32
  }
  func.func @transform_2(%arg0: i32) -> (i32, i32) {
    %c0_i32 = arith.constant 0 : i32
    %c0_i32_0 = arith.constant 0 : i32
    return %arg0, %c0_i32 : i32, i32
  }
  func.func @transform_3(%arg0: i32) -> (i32, i32) {
    %c0_i32 = arith.constant 0 : i32
    %c0_i32_0 = arith.constant 0 : i32
    return %arg0, %c0_i32 : i32, i32
  }
}

module attributes {stable_mosaic.version = 11 : i64} {
  func.func @_layernorm_kernel(%arg0: i32, %arg1: memref<16x32xf32, #tpu.memory_space<vmem>>, %arg2: memref<1x32xf32, #tpu.memory_space<vmem>>, %arg3: memref<1x32xf32, #tpu.memory_space<vmem>>, %arg4: memref<16x32xf32, #tpu.memory_space<vmem>>) attributes {dimension_semantics = [#tpu.dimension_semantics<parallel>], iteration_bounds = array<i64: 1>, scalar_prefetch = 0 : i64, scratch_operands = 0 : i64, tpu.core_type = #tpu.core_type<tc>, window_params = [{transform_indices = @transform_0, window_bounds = array<i64: 16, 32>}, {pipeline_mode = #tpu.pipeline_mode<synchronous>, transform_indices = @transform_1, window_bounds = array<i64: 1, 32>}, {pipeline_mode = #tpu.pipeline_mode<synchronous>, transform_indices = @transform_2, window_bounds = array<i64: 1, 32>}, {transform_indices = @transform_3, window_bounds = array<i64: 16, 32>}]} {
    %c0 = arith.constant 0 : index
    %c0_0 = arith.constant 0 : index
    %0 = vector.load %arg1[%c0, %c0_0] : memref<16x32xf32, #tpu.memory_space<vmem>>, vector<16x32xf32>
    %cst = arith.constant dense<0.000000e+00> : vector<16xf32>
    %1 = vector.multi_reduction <add>, %0, %cst [1] : vector<16x32xf32> to vector<16xf32>
    %2 = vector.shape_cast %1 : vector<16xf32> to vector<16x1xf32>
    %cst_1 = arith.constant 3.200000e+01 : f32
    %3 = vector.broadcast %cst_1 : f32 to vector<16x1xf32>
    %4 = arith.divf %2, %3 : vector<16x1xf32>
    %5 = vector.broadcast %4 : vector<16x1xf32> to vector<16x32xf32>
    %6 = arith.subf %0, %5 : vector<16x32xf32>
    %7 = arith.mulf %6, %6 : vector<16x32xf32>
    %cst_2 = arith.constant dense<0.000000e+00> : vector<16xf32>
    %8 = vector.multi_reduction <add>, %7, %cst_2 [1] : vector<16x32xf32> to vector<16xf32>
    %9 = vector.shape_cast %8 : vector<16xf32> to vector<16x1xf32>
    %cst_3 = arith.constant 0.0322580636 : f32
    %10 = vector.broadcast %cst_3 : f32 to vector<16x1xf32>
    %11 = arith.mulf %9, %10 : vector<16x1xf32>
    %12 = math.sqrt %11 : vector<16x1xf32>
    %cst_4 = arith.constant 9.99999997E-7 : f32
    %13 = vector.broadcast %cst_4 : f32 to vector<16x1xf32>
    %14 = arith.addf %12, %13 : vector<16x1xf32>
    %cst_5 = arith.constant 1.000000e+00 : f32
    %15 = vector.broadcast %cst_5 : f32 to vector<16x1xf32>
    %16 = arith.divf %15, %14 : vector<16x1xf32>
    %c0_6 = arith.constant 0 : index
    %c0_7 = arith.constant 0 : index
    %17 = vector.load %arg2[%c0_6, %c0_7] : memref<1x32xf32, #tpu.memory_space<vmem>>, vector<1x32xf32>
    %c0_8 = arith.constant 0 : index
    %c0_9 = arith.constant 0 : index
    %18 = vector.load %arg3[%c0_8, %c0_9] : memref<1x32xf32, #tpu.memory_space<vmem>>, vector<1x32xf32>
    %19 = vector.broadcast %16 : vector<16x1xf32> to vector<16x32xf32>
    %20 = arith.mulf %6, %19 : vector<16x32xf32>
    %21 = vector.broadcast %17 : vector<1x32xf32> to vector<16x32xf32>
    %22 = arith.mulf %20, %21 : vector<16x32xf32>
    %23 = vector.broadcast %18 : vector<1x32xf32> to vector<16x32xf32>
    %24 = arith.addf %22, %23 : vector<16x32xf32>
    %c0_10 = arith.constant 0 : index
    %c0_11 = arith.constant 0 : index
    %25 = vector.load %arg4[%c0_10, %c0_11] : memref<16x32xf32, #tpu.memory_space<vmem>>, vector<16x32xf32>
    tpu.vector_store %arg4[%c0_10, %c0_11], %24 {strides = array<i32>} : memref<16x32xf32, #tpu.memory_space<vmem>>, vector<16x32xf32>,
    return
  }
  func.func @transform_0(%arg0: i32) -> (i32, i32) {
    %c0_i32 = arith.constant 0 : i32
    %c0_i32_0 = arith.constant 0 : i32
    return %arg0, %c0_i32 : i32, i32
  }
  func.func @transform_1(%arg0: i32) -> (i32, i32) {
    %c0_i32 = arith.constant 0 : i32
    %c0_i32_0 = arith.constant 0 : i32
    %c0_i32_1 = arith.constant 0 : i32
    return %c0_i32, %c0_i32_0 : i32, i32
  }
  func.func @transform_2(%arg0: i32) -> (i32, i32) {
    %c0_i32 = arith.constant 0 : i32
    %c0_i32_0 = arith.constant 0 : i32
    %c0_i32_1 = arith.constant 0 : i32
    return %c0_i32, %c0_i32_0 : i32, i32
  }
  func.func @transform_3(%arg0: i32) -> (i32, i32) {
    %c0_i32 = arith.constant 0 : i32
    %c0_i32_0 = arith.constant 0 : i32
    return %arg0, %c0_i32 : i32, i32
  }
}

</mosaic_0001>

<llo_original>
// kernel: fwd_eval.3
$region0: #{fwd_eval.3}
  #allocation0 [shape = 'u32[]', space=smem, size = 0x4, offset = 0x4, fixed_abs, tag = 'smem constant byte address 0x4 - core index']
  #allocation1 [shape = 'u32[144,128]{1,0:T(1,128)}', space=vmem, size = 0x12000, scoped, tag = 'internal scratch']
  #allocation2 [shape = 's32[1]{0:T(128)S(6)}', space=smem, size = 0x200, scoped, tag = 'scoped memory for fwd_eval.3']
  %s0 = inlined_call_operand.<no memory space> [shape: s32[1], index: 0, kind: input, shape index: {}]
  %s1 = inlined_call_operand.vmem [shape: f32[16,32], index: 1, kind: input, shape index: {}, may-alias: {1,3}]
  %s2 = inlined_call_operand.vmem [shape: f32[16,32], index: 2, kind: input, shape index: {}]
  %s3 = inlined_call_operand.vmem [shape: f32[16,32], index: 3, kind: output, shape index: {}, may-alias: {1,3}]
  %s4 = sld [smem:[#allocation0]]
  $region22: #{fwd_eval.3} parent=0
    _
  %s6 = ssub.s32 1, %s4
  %s7 = scalar_select 0, %s6, %s4
  %8 = sst [smem:[#allocation2]] %s0
  // Predicated region
  $region2: #{fwd_eval.3} parent=0 // pred_check
    _
  $region3: #{fwd_eval.3} parent=0 // pred_check_branch
    %10 = sbr.rel (0) target = $region5
  $region4: #{fwd_eval.3} parent=0 // pred_region
    _
  $region5: #{fwd_eval.3} parent=0 // pred_fallthru
    _
  // Predicated region
  $region6: #{fwd_eval.3} parent=0 // pred_check
    _
  $region7: #{fwd_eval.3} parent=0 // pred_check_branch
    %12 = sbr.rel (0) target = $region9
  $region8: #{fwd_eval.3} parent=0 // pred_region
    _
  $region9: #{fwd_eval.3} parent=0 // pred_fallthru
    _
  // Predicated region
  $region10: #{fwd_eval.3} parent=0 // pred_check
    _
  $region11: #{fwd_eval.3} parent=0 // pred_check_branch
    %14 = sbr.rel (0) target = $region13
  $region12: #{fwd_eval.3} parent=0 // pred_region
    _
  $region13: #{fwd_eval.3} parent=0 // pred_fallthru
    _
  %v15 = vld [vmem:[%s1] sm:$0xff]
  %v16 = vld [vmem:[%s1 + $0x8] sm:$0xff]
  %v17 = vld [vmem:[%s2] sm:$0xff]
  %v18 = vld [vmem:[%s2 + $0x8] sm:$0xff]
  %v19 = vadd.f32 %v15, %v17
  %v20 = vadd.f32 %v16, %v18
  %vm21 = vcmask 261120
  %22 = vst.msk [vmem:[%s3] sm:$0xff] %vm21, %v19
  %23 = vst.msk [vmem:[%s3 + $0x8] sm:$0xff] %vm21, %v20
  // Predicated region
  $region14: #{fwd_eval.3} parent=0 // pred_check
    _
  $region15: #{fwd_eval.3} parent=0 // pred_check_branch
    %25 = sbr.rel (0) target = $region17
  $region16: #{fwd_eval.3} parent=0 // pred_region
    _
  $region17: #{fwd_eval.3} parent=0 // pred_fallthru
    _
  // Predicated region
  $region18: #{fwd_eval.3} parent=0 // pred_check
    _
  $region19: #{fwd_eval.3} parent=0 // pred_check_branch
    %27 = sbr.rel (0) target = $region21
  $region20: #{fwd_eval.3} parent=0 // pred_region
    _
  $region21: #{fwd_eval.3} parent=0 // pred_fallthru
    _

// kernel: fwd_eval.2
$region0: #{fwd_eval.2}
  #allocation0 [shape = 'u32[]', space=smem, size = 0x4, offset = 0x4, fixed_abs, tag = 'smem constant byte address 0x4 - core index']
  #allocation1 [shape = 'u32[144,128]{1,0:T(1,128)}', space=vmem, size = 0x12000, scoped, tag = 'internal scratch']
  %s0 = inlined_call_operand.vmem [shape: f32[16,32], index: 0, kind: input, shape index: {}]
  %s1 = inlined_call_operand.vmem [shape: f32[1,32], index: 1, kind: input, shape index: {}]
  %s2 = inlined_call_operand.vmem [shape: f32[1,32], index: 2, kind: input, shape index: {}]
  %s3 = inlined_call_operand.vmem [shape: f32[16,32], index: 3, kind: output, shape index: {}]
  %s4 = sld [smem:[#allocation0]]
  $region22: #{fwd_eval.2} parent=0
    _
  %s6 = ssub.s32 1, %s4
  %s7 = scalar_select 0, %s6, %s4
  // Predicated region
  $region2: #{fwd_eval.2} parent=0 // pred_check
    _
  $region3: #{fwd_eval.2} parent=0 // pred_check_branch
    %9 = sbr.rel (0) target = $region5
  $region4: #{fwd_eval.2} parent=0 // pred_region
    _
  $region5: #{fwd_eval.2} parent=0 // pred_fallthru
    _
  // Predicated region
  $region6: #{fwd_eval.2} parent=0 // pred_check
    _
  $region7: #{fwd_eval.2} parent=0 // pred_check_branch
    %11 = sbr.rel (0) target = $region9
  $region8: #{fwd_eval.2} parent=0 // pred_region
    _
  $region9: #{fwd_eval.2} parent=0 // pred_fallthru
    _
  // Predicated region
  $region10: #{fwd_eval.2} parent=0 // pred_check
    _
  $region11: #{fwd_eval.2} parent=0 // pred_check_branch
    %13 = sbr.rel (0) target = $region13
  $region12: #{fwd_eval.2} parent=0 // pred_region
    _
  $region13: #{fwd_eval.2} parent=0 // pred_fallthru
    _
  %v14 = vld [vmem:[%s0] sm:$0xff]
  %v15 = vld [vmem:[%s0 + $0x8] sm:$0xff]
  %vm16 = vcmask 261120
  %v17 = vsel %vm16, %v14, 0.0
  %18 = vadd.xlane.f32.xlu0 %v17
  %v19 = vpop.xlane.xlu0 %18
  %v20 = vsel %vm16, %v15, 0.0
  %21 = vadd.xlane.f32.xlu0 %v20
  %v22 = vpop.xlane.xlu0 %21
  %v23 = vrcp.pop 32.0
  %v24 = vmul.f32 %v19, %v23
  %v25 = vmul.f32 %v22, %v23
  %v26 = vsub.f32 %v14, %v24
  %v27 = vsub.f32 %v15, %v25
  %v28 = vmul.f32 %v26, %v26
  %v29 = vmul.f32 %v27, %v27
  %v30 = vsel %vm16, %v28, 0.0
  %31 = vadd.xlane.f32.xlu0 %v30
  %v32 = vpop.xlane.xlu0 %31
  %v33 = vsel %vm16, %v29, 0.0
  %34 = vadd.xlane.f32.xlu0 %v33
  %v35 = vpop.xlane.xlu0 %34
  %v36 = vmul.f32 %v32, 0.032258064
  %v37 = vmul.f32 %v35, 0.032258064
  %v38 = vrsqrt.pop %v36
  %v39 = vmul.f32 %v36, %v38
  %vm40 = vcmp.eq.f32.partialorder %v36, inf
  %v41 = vsel %vm40, %v36, %v39
  %vm42 = vcmp.eq.f32.partialorder %v36, 0.0
  %v43 = vand.u32 %v36, 2147483648
  %v44 = vsel %vm42, %v43, %v41
  %v45 = vrsqrt.pop %v37
  %v46 = vmul.f32 %v37, %v45
  %vm47 = vcmp.eq.f32.partialorder %v37, inf
  %v48 = vsel %vm47, %v37, %v46
  %vm49 = vcmp.eq.f32.partialorder %v37, 0.0
  %v50 = vand.u32 %v37, 2147483648
  %v51 = vsel %vm49, %v50, %v48
  %v52 = vadd.f32 %v44, 1e-06
  %v53 = vadd.f32 %v51, 1e-06
  %v54 = vrcp.pop %v52
  %v55 = vmul.f32 1.0, %v54
  %v56 = vrcp.pop %v53
  %v57 = vmul.f32 1.0, %v56
  %v58 = vld [vmem:[%s1] sm:$0x1]
  %v59 = vld [vmem:[%s2] sm:$0x1]
  %v60 = vmul.f32 %v26, %v55
  %v61 = vmul.f32 %v27, %v57
  %v63 = vlaneseq
  %v64 = vshrl.u32 %v63, 7
  %v65 = vsub.s32 0, %v64
  %v66 = vrot.slane %v58, %v65
  %v68 = vmul.f32 %v60, %v66
  %v69 = vmul.f32 %v61, %v66
  %v71 = vlaneseq
  %v72 = vshrl.u32 %v71, 7
  %v73 = vsub.s32 0, %v72
  %v74 = vrot.slane %v59, %v73
  %v76 = vadd.f32 %v68, %v74
  %v77 = vadd.f32 %v69, %v74
  %78 = vst.msk [vmem:[%s3] sm:$0xff] %vm16, %v76
  %79 = vst.msk [vmem:[%s3 + $0x8] sm:$0xff] %vm16, %v77
  // Predicated region
  $region14: #{fwd_eval.2} parent=0 // pred_check
    _
  $region15: #{fwd_eval.2} parent=0 // pred_check_branch
    %81 = sbr.rel (0) target = $region17
  $region16: #{fwd_eval.2} parent=0 // pred_region
    _
  $region17: #{fwd_eval.2} parent=0 // pred_fallthru
    _
  // Predicated region
  $region18: #{fwd_eval.2} parent=0 // pred_check
    _
  $region19: #{fwd_eval.2} parent=0 // pred_check_branch
    %83 = sbr.rel (0) target = $region21
  $region20: #{fwd_eval.2} parent=0 // pred_region
    _
  $region21: #{fwd_eval.2} parent=0 // pred_fallthru
    _

</llo_original>
